<compile_context>
chip_gen: v7x
topology: tpu7x:2x2x1
jax: 0.10.0
libtpu: 0.0.40
codegen_flags: <defaults>
</compile_context>

<pallas_src>
import functools

import jax
import jax.numpy as jnp
from jax.experimental import pallas as pl
from jax.experimental.pallas import tpu as pltpu


def local_attention_kernel(x_ref, wband_ref, expand_ref, reduce_ref, out_ref, *,
                           B, TB, L, D):
    """One batch tile (TB rows) per grid step.

    x_ref:      (TB, L*D)   flattened input tile (lane-dense)
    wband_ref:  (L*D, L)    banded conv weight (resident across grid steps)
    expand_ref: (L, L*D)    0/1 matrix broadcasting a per-position weight over its D lanes
    reduce_ref: (L*D, D)    0/1 matrix summing each embedding lane over the L positions
    out_ref:    (TB, D)     per-tile output
    """
    x = x_ref[...]                                                     # (TB, L*D) f32

    # Conv scores: ONE matmul, TB rows pushed (not TB*L). Default matmul precision is
    # already the bf16 MXU pass, which is fine since the scores only feed a softmax.
    s = jnp.dot(x, wband_ref[...], preferred_element_type=jnp.float32)  # (TB, L), lane-dense
    # (Conv2d bias omitted: softmax over L is shift-invariant, so it cancels exactly.)

    if B % TB != 0:
        # Ragged last batch tile: rows >= rows_valid of the block hold unspecified data
        # (Pallas pads the partial block); zero their scores so the tail stays finite.
        # Their output rows are dropped by the partial writeback anyway.
        rows_valid = B - pl.program_id(0) * TB
        row_id = jax.lax.broadcasted_iota(jnp.int32, (TB, L), 0)
        s = jnp.where(row_id < rows_valid, s, 0.0)

    # Softmax over the sequence (PyTorch Softmax(dim=2)), fully lane-dense over L.
    m = jnp.max(s, axis=1, keepdims=True)                              # (TB, 1)
    e = jnp.exp(s - m)                                                 # (TB, L)   EUP
    denom = jnp.sum(e, axis=1, keepdims=True)                          # (TB, 1)   lane reduce

    # Broadcast the (unnormalized) weights over the D lanes of each position and take the
    # weighted sum over the sequence — both as small 0/1 matmuls, so nothing is lane-sparse
    # and no reshape/relayout of x is needed.
    e_exp = jnp.dot(e, expand_ref[...], preferred_element_type=jnp.float32)       # (TB, L*D)
    acc = jnp.dot(x * e_exp, reduce_ref[...], preferred_element_type=jnp.float32)  # (TB, D)

    out_ref[...] = (acc * pl.reciprocal(denom, approx=True)).astype(out_ref.dtype)


def _vmem_capacity_bytes():
    try:
        cap = getattr(pltpu.get_tpu_info(), "vmem_capacity_bytes", None)
        if cap:
            return int(cap)
    except Exception:
        pass
    return 64 * 1024 * 1024            # conservative fallback = v7x per-TensorCore VMEM


def _budgets():
    """(target input-tile bytes, scoped vmem_limit_bytes), generation-aware.

    Per grid step VMEM ~= 2x tile (double-buffered input) + ~2x tile of temporaries
    (e_exp and x*e_exp) + the small resident weight matrices, so an 8 MiB tile is ~35-40 MiB
    scoped VMEM — comfortable under 96 MiB on v5e/v6e; v7x (64 MiB) gets ~3.5 MiB tiles and
    a <= 48 MiB limit.
    """
    cap = _vmem_capacity_bytes()
    if cap >= 100 * 1024 * 1024:       # v5e / v6e: 128 MiB physical VMEM
        return 8 * 1024 * 1024, 96 * 1024 * 1024
    return 3 * 1024 * 1024 + 512 * 1024, 48 * 1024 * 1024   # v7x: 64 MiB per TensorCore


def _choose_batch_tile(B, L, D, *, target_bytes, min_grid_steps=6,
                       min_tile_bytes=512 * 1024):
    """Batch-tile rows: big enough to amortize the ~0.35us/step pipeline overhead, small
    enough to leave >= min_grid_steps grid steps for big batches (keeps double-buffering
    busy and feeds both v7x TensorCores >= 3 steps each) without dropping below ~512 KiB
    tiles, and a multiple of 8 sublanes unless one tile covers the whole batch.
    With the flattened layout there is no lane padding, so L*D*4 is the exact row size."""
    row_bytes = L * D * 4
    tb = max(1, target_bytes // row_bytes)
    rows_floor = max(8, -(-min_tile_bytes // row_bytes))
    rows_for_steps = -(-B // min_grid_steps)
    if rows_for_steps >= rows_floor:
        tb = min(tb, rows_for_steps)
    if tb >= B:
        return B                        # single full-batch tile (block dim == array dim is legal)
    return max(8, (tb // 8) * 8)


def local_attention(x, weight, bias, win_size, *, block_b=None):
    """x: (B, L, D); weight: (win_size, D) (== Conv2d weight[0, 0]); bias: (1,).
    Returns (B, D)."""
    B, L, D = x.shape
    if win_size % 2 != 1:
        raise ValueError("LocalAttention requires an odd ctx_win_size")
    pad = (win_size - 1) // 2
    del bias  # Softmax over L is shift-invariant -> the Conv2d bias cancels exactly.

    target_bytes, vmem_limit = _budgets()
    TB = block_b if block_b is not None else _choose_batch_tile(B, L, D, target_bytes=target_bytes)
    nb = -(-B // TB)                    # ragged tail handled in-kernel; no batch padding

    weight = jnp.asarray(weight, jnp.float32)

    # Banded conv weight: wband[j*D + d, i] = weight[j - i + pad, d] when the tap exists, else 0.
    j = jnp.arange(L)[:, None]
    i = jnp.arange(L)[None, :]
    k = j - i + pad                                               # (L, L) tap index
    valid = (k >= 0) & (k < win_size)
    taps = weight[jnp.clip(k, 0, win_size - 1)]                   # (L, L, D)
    wband = jnp.where(valid[:, :, None], taps, 0.0)               # (L, L, D)
    wband = wband.transpose(0, 2, 1).reshape(L * D, L)            # (L*D, L)

    # 0/1 helper matrices (compile-time constants).
    lane = jnp.arange(L * D)
    expand_mat = (lane[None, :] // D == jnp.arange(L)[:, None]).astype(jnp.float32)  # (L, L*D)
    reduce_mat = (lane[:, None] % D == jnp.arange(D)[None, :]).astype(jnp.float32)   # (L*D, D)

    # Lane-dense layout for the kernel (layout plumbing only; x is otherwise read once).
    x2 = x.reshape(B, L * D)

    kernel = functools.partial(local_attention_kernel, B=B, TB=TB, L=L, D=D)

    return pl.pallas_call(
        kernel,
        out_shape=jax.ShapeDtypeStruct((B, D), x.dtype),
        grid_spec=pltpu.PrefetchScalarGridSpec(
            num_scalar_prefetch=0,
            grid=(nb,),
            in_specs=[
                pl.BlockSpec((TB, L * D), lambda b: (b, 0)),   # batch tile of flattened x
                pl.BlockSpec((L * D, L), lambda b: (0, 0)),    # banded conv weight (resident)
                pl.BlockSpec((L, L * D), lambda b: (0, 0)),    # expand matrix (resident)
                pl.BlockSpec((L * D, D), lambda b: (0, 0)),    # reduce matrix (resident)
            ],
            out_specs=pl.BlockSpec((TB, D), lambda b: (b, 0)),
        ),
        compiler_params=pltpu.CompilerParams(
            dimension_semantics=("parallel",),
            vmem_limit_bytes=vmem_limit,
        ),
    )(x2, wband, expand_mat, reduce_mat)


def _reference(x, weight, bias, win_size):
    L = x.shape[1]
    pad = (win_size - 1) // 2
    xpad = jnp.pad(x, ((0, 0), (pad, pad), (0, 0)))
    s = sum(jnp.einsum("bld,d->bl", xpad[:, k:k + L, :], weight[k])
            for k in range(win_size)) + bias[0]
    scores = jax.nn.softmax(s, axis=1)
    return jnp.einsum("bld,bl->bd", x, scores)


if __name__ == "__main__":
    key = jax.random.PRNGKey(0)
    B, L, D = 2, 16, 32          # bsz, max_doc_len, word_embed_dim
    win_size = 5                 # ctx_win_size (odd, as the module requires)

    kx, kw, kb = jax.random.split(key, 3)
    x = jax.random.normal(kx, (B, L, D), dtype=jnp.float32)

    # Deterministic Conv2d-style init: U(-1/sqrt(fan_in), 1/sqrt(fan_in)), fan_in = 1*win*D
    bound = 1.0 / float(win_size * D) ** 0.5
    weight = jax.random.uniform(kw, (win_size, D), jnp.float32, -bound, bound)
    bias = jax.random.uniform(kb, (1,), jnp.float32, -bound, bound)

    out = jax.block_until_ready(local_attention(x, weight, bias, win_size))
    ref = _reference(x, weight, bias, win_size)
    assert out.shape == (B, D)
    assert jnp.allclose(out, ref, rtol=5e-3, atol=5e-3), "mismatch vs reference"

    # Ragged-batch case (B % TB != 0): exercises multi-step grid, resident weight blocks
    # and the in-kernel tail mask — no wrapper-side batch padding anywhere.
    B2 = 11
    x2 = jax.random.normal(jax.random.PRNGKey(1), (B2, L, D), dtype=jnp.float32)
    out2 = jax.block_until_ready(local_attention(x2, weight, bias, win_size, block_b=8))
    ref2 = _reference(x2, weight, bias, win_size)
    assert out2.shape == (B2, D)
    assert jnp.allclose(out2, ref2, rtol=5e-3, atol=5e-3), "mismatch vs reference (ragged batch)"

    print("KERNEL_OK")
</pallas_src>

<mosaic_0001>
module attributes {stable_mosaic.version = 11 : i64} {
  func.func @local_attention_kernel(%arg0: i32, %arg1: memref<2x512xf32, #tpu.memory_space<vmem>>, %arg2: memref<512x16xf32, #tpu.memory_space<vmem>>, %arg3: memref<16x512xf32, #tpu.memory_space<vmem>>, %arg4: memref<512x32xf32, #tpu.memory_space<vmem>>, %arg5: memref<2x32xf32, #tpu.memory_space<vmem>>) attributes {dimension_semantics = [#tpu.dimension_semantics<parallel>], iteration_bounds = array<i64: 1>, scalar_prefetch = 0 : i64, scratch_operands = 0 : i64, tpu.core_type = #tpu.core_type<tc>, window_params = [{transform_indices = @transform_0, window_bounds = array<i64: 2, 512>}, {pipeline_mode = #tpu.pipeline_mode<synchronous>, transform_indices = @transform_1, window_bounds = array<i64: 512, 16>}, {pipeline_mode = #tpu.pipeline_mode<synchronous>, transform_indices = @transform_2, window_bounds = array<i64: 16, 512>}, {pipeline_mode = #tpu.pipeline_mode<synchronous>, transform_indices = @transform_3, window_bounds = array<i64: 512, 32>}, {transform_indices = @transform_4, window_bounds = array<i64: 2, 32>}]} {
    %c0 = arith.constant 0 : index
    %c0_0 = arith.constant 0 : index
    %0 = vector.load %arg1[%c0, %c0_0] : memref<2x512xf32, #tpu.memory_space<vmem>>, vector<2x512xf32>
    %c0_1 = arith.constant 0 : index
    %c0_2 = arith.constant 0 : index
    %1 = vector.load %arg2[%c0_1, %c0_2] : memref<512x16xf32, #tpu.memory_space<vmem>>, vector<512x16xf32>
    %cst = arith.constant dense<0.000000e+00> : vector<2x16xf32>
    %2 = tpu.matmul %0, %1, %cst {dimension_numbers = #tpu.dot_dimension_numbers<[1], [0], [0], [1], [0, 0, 1, 1], [], []>} : vector<2x512xf32>, vector<512x16xf32>, vector<2x16xf32> -> vector<2x16xf32>
    %cst_3 = arith.constant dense<0xFF800000> : vector<2xf32>
    %3 = vector.multi_reduction <maximumf>, %2, %cst_3 [1] : vector<2x16xf32> to vector<2xf32>
    %4 = vector.shape_cast %3 : vector<2xf32> to vector<2x1xf32>
    %5 = vector.broadcast %4 : vector<2x1xf32> to vector<2x16xf32>
    %6 = arith.subf %2, %5 : vector<2x16xf32>
    %7 = math.exp %6 : vector<2x16xf32>
    %cst_4 = arith.constant dense<0.000000e+00> : vector<2xf32>
    %8 = vector.multi_reduction <add>, %7, %cst_4 [1] : vector<2x16xf32> to vector<2xf32>
    %9 = vector.shape_cast %8 : vector<2xf32> to vector<2x1xf32>
    %c0_5 = arith.constant 0 : index
    %c0_6 = arith.constant 0 : index
    %10 = vector.load %arg3[%c0_5, %c0_6] : memref<16x512xf32, #tpu.memory_space<vmem>>, vector<16x512xf32>
    %cst_7 = arith.constant dense<0.000000e+00> : vector<2x512xf32>
    %11 = tpu.matmul %7, %10, %cst_7 {dimension_numbers = #tpu.dot_dimension_numbers<[1], [0], [0], [1], [0, 0, 1, 1], [], []>} : vector<2x16xf32>, vector<16x512xf32>, vector<2x512xf32> -> vector<2x512xf32>
    %12 = arith.mulf %0, %11 : vector<2x512xf32>
    %c0_8 = arith.constant 0 : index
    %c0_9 = arith.constant 0 : index
    %13 = vector.load %arg4[%c0_8, %c0_9] : memref<512x32xf32, #tpu.memory_space<vmem>>, vector<512x32xf32>
    %cst_10 = arith.constant dense<0.000000e+00> : vector<2x32xf32>
    %14 = tpu.matmul %12, %13, %cst_10 {dimension_numbers = #tpu.dot_dimension_numbers<[1], [0], [0], [1], [0, 0, 1, 1], [], []>} : vector<2x512xf32>, vector<512x32xf32>, vector<2x32xf32> -> vector<2x32xf32>
    %15 = tpu.reciprocal %9 {approx = true} : vector<2x1xf32> -> vector<2x1xf32>
    %16 = vector.broadcast %15 : vector<2x1xf32> to vector<2x32xf32>
    %17 = arith.mulf %14, %16 : vector<2x32xf32>
    %c0_11 = arith.constant 0 : index
    %c0_12 = arith.constant 0 : index
    %18 = vector.load %arg5[%c0_11, %c0_12] : memref<2x32xf32, #tpu.memory_space<vmem>>, vector<2x32xf32>
    tpu.vector_store %arg5[%c0_11, %c0_12], %17 {strides = array<i32>} : memref<2x32xf32, #tpu.memory_space<vmem>>, vector<2x32xf32>,
    return
  }
  func.func @transform_0(%arg0: i32) -> (i32, i32) {
    %c0_i32 = arith.constant 0 : i32
    %c0_i32_0 = arith.constant 0 : i32
    return %arg0, %c0_i32 : i32, i32
  }
  func.func @transform_1(%arg0: i32) -> (i32, i32) {
    %c0_i32 = arith.constant 0 : i32
    %c0_i32_0 = arith.constant 0 : i32
    %c0_i32_1 = arith.constant 0 : i32
    return %c0_i32, %c0_i32_0 : i32, i32
  }
  func.func @transform_2(%arg0: i32) -> (i32, i32) {
    %c0_i32 = arith.constant 0 : i32
    %c0_i32_0 = arith.constant 0 : i32
    %c0_i32_1 = arith.constant 0 : i32
    return %c0_i32, %c0_i32_0 : i32, i32
  }
  func.func @transform_3(%arg0: i32) -> (i32, i32) {
    %c0_i32 = arith.constant 0 : i32
    %c0_i32_0 = arith.constant 0 : i32
    %c0_i32_1 = arith.constant 0 : i32
    return %c0_i32, %c0_i32_0 : i32, i32
  }
  func.func @transform_4(%arg0: i32) -> (i32, i32) {
    %c0_i32 = arith.constant 0 : i32
    %c0_i32_0 = arith.constant 0 : i32
    return %arg0, %c0_i32 : i32, i32
  }
}

</mosaic_0001>

<llo_original>
// kernel: tpu_custom_call.1
$region0: #{tpu_custom_call.1}
  #allocation0 [shape = 'u32[]', space=smem, size = 0x4, offset = 0x4, fixed_abs, tag = 'smem constant byte address 0x4 - core index']
  #allocation1 [shape = 'u32[144,128]{1,0:T(1,128)}', space=vmem, size = 0x12000, scoped, tag = 'internal scratch']
  %s0 = inlined_call_operand.vmem [shape: f32[2,512], index: 0, kind: input, shape index: {}]
  %s1 = inlined_call_operand.vmem [shape: f32[512,16], index: 1, kind: input, shape index: {}]
  %s2 = inlined_call_operand.vmem [shape: f32[16,512], index: 2, kind: input, shape index: {}]
  %s3 = inlined_call_operand.vmem [shape: f32[512,32], index: 3, kind: input, shape index: {}]
  %s4 = inlined_call_operand.hbm [shape: f32[2,32], index: 4, kind: output, shape index: {}]
  %s5 = sld [smem:[#allocation0]]
  $region26: #{tpu_custom_call.1} parent=0
    _
  %s7 = ssub.s32 1, %s5
  %s8 = scalar_select 0, %s7, %s5
  $region1: #{tpu_custom_call.1} parent=0
    #allocation2 [shape = 'u8[1024]{0}', space=vmem, size = 0x400, scoped, tag = 'output window, operand 0, single buffered']
    #allocation3 [shape = 's32[1]{0}', space=sflag, size = 0x4, scoped, tag = 'scoped memory for tpu_custom_call.1']
    %9 = vsyncpa [#allocation3], 0
    // Predicated region
    $region2: #{tpu_custom_call.1} parent=1 // pred_check
      _
    $region3: #{tpu_custom_call.1} parent=1 // pred_check_branch
      %11 = sbr.rel (0) target = $region5
    $region4: #{tpu_custom_call.1} parent=1 // pred_region
      _
    $region5: #{tpu_custom_call.1} parent=1 // pred_fallthru
      _
    // Predicated region
    $region6: #{tpu_custom_call.1} parent=1 // pred_check
      _
    $region7: #{tpu_custom_call.1} parent=1 // pred_check_branch
      %13 = sbr.rel (0) target = $region9
    $region8: #{tpu_custom_call.1} parent=1 // pred_region
      _
    $region9: #{tpu_custom_call.1} parent=1 // pred_fallthru
      _
    // Predicated region
    $region10: #{tpu_custom_call.1} parent=1 // pred_check
      _
    $region11: #{tpu_custom_call.1} parent=1 // pred_check_branch
      %15 = sbr.rel (0) target = $region13
    $region12: #{tpu_custom_call.1} parent=1 // pred_region
      _
    $region13: #{tpu_custom_call.1} parent=1 // pred_fallthru
      _
    // Predicated region
    $region14: #{tpu_custom_call.1} parent=1 // pred_check
      _
    $region15: #{tpu_custom_call.1} parent=1 // pred_check_branch
      %17 = sbr.rel (0) target = $region17
    $region16: #{tpu_custom_call.1} parent=1 // pred_region
      _
    $region17: #{tpu_custom_call.1} parent=1 // pred_fallthru
      _
    %v18 = vld [vmem:[%s0] sm:$0xff]
    %v19 = vld [vmem:[%s1] sm:$0xff]
    %v20 = vld [vmem:[%s1 + $0x8] sm:$0xff]
    %v21 = vld [vmem:[%s1 + $0x10] sm:$0xff]
    %v22 = vld [vmem:[%s1 + $0x18] sm:$0xff]
    %v23 = vld [vmem:[%s1 + $0x20] sm:$0xff]
    %v24 = vld [vmem:[%s1 + $0x28] sm:$0xff]
    %v25 = vld [vmem:[%s1 + $0x30] sm:$0xff]
    %v26 = vld [vmem:[%s1 + $0x38] sm:$0xff]
    %v27 = vld [vmem:[%s1 + $0x40] sm:$0xff]
    %v28 = vld [vmem:[%s1 + $0x48] sm:$0xff]
    %v29 = vld [vmem:[%s1 + $0x50] sm:$0xff]
    %v30 = vld [vmem:[%s1 + $0x58] sm:$0xff]
    %v31 = vld [vmem:[%s1 + $0x60] sm:$0xff]
    %v32 = vld [vmem:[%s1 + $0x68] sm:$0xff]
    %v33 = vld [vmem:[%s1 + $0x70] sm:$0xff]
    %v34 = vld [vmem:[%s1 + $0x78] sm:$0xff]
    %v35 = vld [vmem:[%s1 + $0x80] sm:$0xff]
    %v36 = vld [vmem:[%s1 + $0x88] sm:$0xff]
    %v37 = vld [vmem:[%s1 + $0x90] sm:$0xff]
    %v38 = vld [vmem:[%s1 + $0x98] sm:$0xff]
    %v39 = vld [vmem:[%s1 + $0xa0] sm:$0xff]
    %v40 = vld [vmem:[%s1 + $0xa8] sm:$0xff]
    %v41 = vld [vmem:[%s1 + $0xb0] sm:$0xff]
    %v42 = vld [vmem:[%s1 + $0xb8] sm:$0xff]
    %v43 = vld [vmem:[%s1 + $0xc0] sm:$0xff]
    %v44 = vld [vmem:[%s1 + $0xc8] sm:$0xff]
    %v45 = vld [vmem:[%s1 + $0xd0] sm:$0xff]
    %v46 = vld [vmem:[%s1 + $0xd8] sm:$0xff]
    %v47 = vld [vmem:[%s1 + $0xe0] sm:$0xff]
    %v48 = vld [vmem:[%s1 + $0xe8] sm:$0xff]
    %v49 = vld [vmem:[%s1 + $0xf0] sm:$0xff]
    %v50 = vld [vmem:[%s1 + $0xf8] sm:$0xff]
    %v51 = vld [vmem:[%s1 + $0x100] sm:$0xff]
    %v52 = vld [vmem:[%s1 + $0x108] sm:$0xff]
    %v53 = vld [vmem:[%s1 + $0x110] sm:$0xff]
    %v54 = vld [vmem:[%s1 + $0x118] sm:$0xff]
    %v55 = vld [vmem:[%s1 + $0x120] sm:$0xff]
    %v56 = vld [vmem:[%s1 + $0x128] sm:$0xff]
    %v57 = vld [vmem:[%s1 + $0x130] sm:$0xff]
    %v58 = vld [vmem:[%s1 + $0x138] sm:$0xff]
    %v59 = vld [vmem:[%s1 + $0x140] sm:$0xff]
    %v60 = vld [vmem:[%s1 + $0x148] sm:$0xff]
    %v61 = vld [vmem:[%s1 + $0x150] sm:$0xff]
    %v62 = vld [vmem:[%s1 + $0x158] sm:$0xff]
    %v63 = vld [vmem:[%s1 + $0x160] sm:$0xff]
    %v64 = vld [vmem:[%s1 + $0x168] sm:$0xff]
    %v65 = vld [vmem:[%s1 + $0x170] sm:$0xff]
    %v66 = vld [vmem:[%s1 + $0x178] sm:$0xff]
    %v67 = vld [vmem:[%s1 + $0x180] sm:$0xff]
    %v68 = vld [vmem:[%s1 + $0x188] sm:$0xff]
    %v69 = vld [vmem:[%s1 + $0x190] sm:$0xff]
    %v70 = vld [vmem:[%s1 + $0x198] sm:$0xff]
    %v71 = vld [vmem:[%s1 + $0x1a0] sm:$0xff]
    %v72 = vld [vmem:[%s1 + $0x1a8] sm:$0xff]
    %v73 = vld [vmem:[%s1 + $0x1b0] sm:$0xff]
    %v74 = vld [vmem:[%s1 + $0x1b8] sm:$0xff]
    %v75 = vld [vmem:[%s1 + $0x1c0] sm:$0xff]
    %v76 = vld [vmem:[%s1 + $0x1c8] sm:$0xff]
    %v77 = vld [vmem:[%s1 + $0x1d0] sm:$0xff]
    %v78 = vld [vmem:[%s1 + $0x1d8] sm:$0xff]
    %v79 = vld [vmem:[%s1 + $0x1e0] sm:$0xff]
    %v80 = vld [vmem:[%s1 + $0x1e8] sm:$0xff]
    %v81 = vld [vmem:[%s1 + $0x1f0] sm:$0xff]
    %v82 = vld [vmem:[%s1 + $0x1f8] sm:$0xff]
    %v84 = vcombine.high %v18, %v18
    %v86 = vunpack.c.l.s4 1983009808
    %v87 = vunpack.c.0.s8 %v86
    %v88 = vlaneseq
    %v89 = vshrl.u32 %v88, 7
    %v90 = vsub.s32 %v87, %v89
    %v91 = vrot.slane %v18, %v90
    %v93 = vunpack.c.l.s4 1983009808
    %v94 = vunpack.c.0.s8 %v93
    %v95 = vlaneseq
    %v96 = vshrl.u32 %v95, 7
    %v97 = vsub.s32 %v94, %v96
    %v98 = vrot.slane %v84, %v97
    %v99 = vcombine.high %v91, %v91
    %v100 = vcombine.high %v98, %v98
    %105 = vmatprep.subr.mxu0 0.0
    %106 = vmatpush1.msra.mxu0 %v19
    %107 = vmatprep.subr.mxu0 0.0
    %108 = vmatpush1.msra.mxu0 %v20
    %109 = vmatprep.subr.mxu0 0.0
    %110 = vmatpush1.msra.mxu0 %v21
    %111 = vmatprep.subr.mxu0 0.0
    %112 = vmatpush1.msra.mxu0 %v22
    %113 = vmatprep.subr.mxu0 0.0
    %114 = vmatpush1.msra.mxu0 %v23
    %115 = vmatprep.subr.mxu0 0.0
    %116 = vmatpush1.msra.mxu0 %v24
    %117 = vmatprep.subr.mxu0 0.0
    %118 = vmatpush1.msra.mxu0 %v25
    %119 = vmatprep.subr.mxu0 0.0
    %120 = vmatpush1.msra.mxu0 %v26
    %121 = vmatprep.subr.mxu0 0.0
    %122 = vmatpush1.msra.mxu0 %v27
    %123 = vmatprep.subr.mxu0 0.0
    %124 = vmatpush1.msra.mxu0 %v28
    %125 = vmatprep.subr.mxu0 0.0
    %126 = vmatpush1.msra.mxu0 %v29
    %127 = vmatprep.subr.mxu0 0.0
    %128 = vmatpush1.msra.mxu0 %v30
    %129 = vmatprep.subr.mxu0 0.0
    %130 = vmatpush1.msra.mxu0 %v31
    %131 = vmatprep.subr.mxu0 0.0
    %132 = vmatpush1.msra.mxu0 %v32
    %133 = vmatprep.subr.mxu0 0.0
    %134 = vmatpush1.msra.mxu0 %v33
    %135 = vmatprep.subr.mxu0 0.0
    %136 = vmatpush1.msra.mxu0 %v34
    %137 = vmatprep.subr.mxu0 0.0
    %138 = vmatpush1.msra.mxu0 %v35
    %139 = vmatprep.subr.mxu0 0.0
    %140 = vmatpush1.msra.mxu0 %v36
    %141 = vmatprep.subr.mxu0 0.0
    %142 = vmatpush1.msra.mxu0 %v37
    %143 = vmatprep.subr.mxu0 0.0
    %144 = vmatpush1.msra.mxu0 %v38
    %145 = vmatprep.subr.mxu0 0.0
    %146 = vmatpush1.msra.mxu0 %v39
    %147 = vmatprep.subr.mxu0 0.0
    %148 = vmatpush1.msra.mxu0 %v40
    %149 = vmatprep.subr.mxu0 0.0
    %150 = vmatpush1.msra.mxu0 %v41
    %151 = vmatprep.subr.mxu0 0.0
    %152 = vmatpush1.msra.mxu0 %v42
    %153 = vmatprep.subr.mxu0 0.0
    %154 = vmatpush1.msra.mxu0 %v43
    %155 = vmatprep.subr.mxu0 0.0
    %156 = vmatpush1.msra.mxu0 %v44
    %157 = vmatprep.subr.mxu0 0.0
    %158 = vmatpush1.msra.mxu0 %v45
    %159 = vmatprep.subr.mxu0 0.0
    %160 = vmatpush1.msra.mxu0 %v46
    %161 = vmatprep.subr.mxu0 0.0
    %162 = vmatpush1.msra.mxu0 %v47
    %163 = vmatprep.subr.mxu0 0.0
    %164 = vmatpush1.msra.mxu0 %v48
    %165 = vmatprep.subr.mxu0 0.0
    %166 = vmatpush1.msra.mxu0 %v49
    %167 = vmatprep.subr.mxu0 0.0
    %168 = vmatpush1.msra.mxu0 %v50
    %169 = vmatprep.mubr.f32.mxu0 %v99
    %170 = vmatmul.mubr.f32.gmra.mrb[0].mxu0 %v91
    %v171 = vpop.f32.mrb[0].mxu0
    %v172 = vadd.f32 0.0, %v171
    %v173 = vpop.f32.mrb[0].mxu0
    %174 = vdwg.mxu0
    %175 = vmatprep.subr.mxu0 0.0
    %176 = vmatpush1.msra.mxu0 %v51
    %177 = vmatprep.subr.mxu0 0.0
    %178 = vmatpush1.msra.mxu0 %v52
    %179 = vmatprep.subr.mxu0 0.0
    %180 = vmatpush1.msra.mxu0 %v53
    %181 = vmatprep.subr.mxu0 0.0
    %182 = vmatpush1.msra.mxu0 %v54
    %183 = vmatprep.subr.mxu0 0.0
    %184 = vmatpush1.msra.mxu0 %v55
    %185 = vmatprep.subr.mxu0 0.0
    %186 = vmatpush1.msra.mxu0 %v56
    %187 = vmatprep.subr.mxu0 0.0
    %188 = vmatpush1.msra.mxu0 %v57
    %189 = vmatprep.subr.mxu0 0.0
    %190 = vmatpush1.msra.mxu0 %v58
    %191 = vmatprep.subr.mxu0 0.0
    %192 = vmatpush1.msra.mxu0 %v59
    %193 = vmatprep.subr.mxu0 0.0
    %194 = vmatpush1.msra.mxu0 %v60
    %195 = vmatprep.subr.mxu0 0.0
    %196 = vmatpush1.msra.mxu0 %v61
    %197 = vmatprep.subr.mxu0 0.0
    %198 = vmatpush1.msra.mxu0 %v62
    %199 = vmatprep.subr.mxu0 0.0
    %200 = vmatpush1.msra.mxu0 %v63
    %201 = vmatprep.subr.mxu0 0.0
    %202 = vmatpush1.msra.mxu0 %v64
    %203 = vmatprep.subr.mxu0 0.0
    %204 = vmatpush1.msra.mxu0 %v65
    %205 = vmatprep.subr.mxu0 0.0
    %206 = vmatpush1.msra.mxu0 %v66
    %207 = vmatprep.subr.mxu0 0.0
    %208 = vmatpush1.msra.mxu0 %v67
    %209 = vmatprep.subr.mxu0 0.0
    %210 = vmatpush1.msra.mxu0 %v68
    %211 = vmatprep.subr.mxu0 0.0
    %212 = vmatpush1.msra.mxu0 %v69
    %213 = vmatprep.subr.mxu0 0.0
    %214 = vmatpush1.msra.mxu0 %v70
    %215 = vmatprep.subr.mxu0 0.0
    %216 = vmatpush1.msra.mxu0 %v71
    %217 = vmatprep.subr.mxu0 0.0
    %218 = vmatpush1.msra.mxu0 %v72
    %219 = vmatprep.subr.mxu0 0.0
    %220 = vmatpush1.msra.mxu0 %v73
    %221 = vmatprep.subr.mxu0 0.0
    %222 = vmatpush1.msra.mxu0 %v74
    %223 = vmatprep.subr.mxu0 0.0
    %224 = vmatpush1.msra.mxu0 %v75
    %225 = vmatprep.subr.mxu0 0.0
    %226 = vmatpush1.msra.mxu0 %v76
    %227 = vmatprep.subr.mxu0 0.0
    %228 = vmatpush1.msra.mxu0 %v77
    %229 = vmatprep.subr.mxu0 0.0
    %230 = vmatpush1.msra.mxu0 %v78
    %231 = vmatprep.subr.mxu0 0.0
    %232 = vmatpush1.msra.mxu0 %v79
    %233 = vmatprep.subr.mxu0 0.0
    %234 = vmatpush1.msra.mxu0 %v80
    %235 = vmatprep.subr.mxu0 0.0
    %236 = vmatpush1.msra.mxu0 %v81
    %237 = vmatprep.subr.mxu0 0.0
    %238 = vmatpush1.msra.mxu0 %v82
    %239 = vmatprep.mubr.f32.mxu0 %v100
    %240 = vmatmul.mubr.f32.gmra.mrb[0].mxu0 %v98
    %v241 = vpop.f32.mrb[0].mxu0
    %v242 = vadd.f32 %v172, %v241
    %v243 = vpop.f32.mrb[0].mxu0
    %244 = vdwg.mxu0
    %vm245 = vcmask 123904
    %v246 = vsel %vm245, %v242, -inf
    %247 = vmax.xlane.f32.xlu0 %v246
    %v248 = vpop.xlane.xlu0 %247
    %v249 = vsub.f32 %v242, %v248
    %v250 = vmul.f32 %v249, 1.442695
    %v251 = vpow.pop %v250
    %v252 = vsel %vm245, %v251, 0.0
    %253 = vadd.xlane.f32.xlu0 %v252
    %v254 = vpop.xlane.xlu0 %253
    %v255 = vld [vmem:[%s2] sm:$0xff]
    %v256 = vld [vmem:[%s2 + $0x8] sm:$0xff]
    %v257 = vld [vmem:[%s2 + $0x10] sm:$0xff]
    %v258 = vld [vmem:[%s2 + $0x18] sm:$0xff]
    %v259 = vld [vmem:[%s2 + $0x20] sm:$0xff]
    %v260 = vld [vmem:[%s2 + $0x28] sm:$0xff]
    %v261 = vld [vmem:[%s2 + $0x30] sm:$0xff]
    %v262 = vld [vmem:[%s2 + $0x38] sm:$0xff]
    %vm263 = vcmask 130048
    %v265 = vsel %vm263, %v251, 0
    %267 = vmatprep.subr.mxu0 %v256
    %268 = vmatpush1.msra.mxu0 %v255
    %269 = vmatprep.subr.mxu0 %v260
    %270 = vmatpush1.msra.mxu0 %v259
    %271 = vmatprep.subr.mxu0 0.0
    %272 = vmatpush1.msra.mxu0 0.0
    %273 = vmatprep.subr.mxu0 0.0
    %274 = vmatpush1.msra.mxu0 0.0
    %275 = vmatprep.subr.mxu0 0.0
    %276 = vmatpush1.msra.mxu0 0.0
    %277 = vmatprep.subr.mxu0 0.0
    %278 = vmatpush1.msra.mxu0 0.0
    %279 = vmatprep.subr.mxu0 0.0
    %280 = vmatpush1.msra.mxu0 0.0
    %281 = vmatprep.subr.mxu0 0.0
    %282 = vmatpush1.msra.mxu0 0.0
    %283 = vmatprep.subr.mxu0 0.0
    %284 = vmatpush1.msra.mxu0 0.0
    %285 = vmatprep.subr.mxu0 0.0
    %286 = vmatpush1.msra.mxu0 0.0
    %287 = vmatprep.subr.mxu0 0.0
    %288 = vmatpush1.msra.mxu0 0.0
    %289 = vmatprep.subr.mxu0 0.0
    %290 = vmatpush1.msra.mxu0 0.0
    %291 = vmatprep.subr.mxu0 0.0
    %292 = vmatpush1.msra.mxu0 0.0
    %293 = vmatprep.subr.mxu0 0.0
    %294 = vmatpush1.msra.mxu0 0.0
    %295 = vmatprep.subr.mxu0 0.0
    %296 = vmatpush1.msra.mxu0 0.0
    %297 = vmatprep.subr.mxu0 0.0
    %298 = vmatpush1.msra.mxu0 0.0
    %299 = vmatprep.subr.mxu0 0.0
    %300 = vmatpush1.msra.mxu0 0.0
    %301 = vmatprep.subr.mxu0 0.0
    %302 = vmatpush1.msra.mxu0 0.0
    %303 = vmatprep.subr.mxu0 0.0
    %304 = vmatpush1.msra.mxu0 0.0
    %305 = vmatprep.subr.mxu0 0.0
    %306 = vmatpush1.msra.mxu0 0.0
    %307 = vmatprep.subr.mxu0 0.0
    %308 = vmatpush1.msra.mxu0 0.0
    %309 = vmatprep.subr.mxu0 0.0
    %310 = vmatpush1.msra.mxu0 0.0
    %311 = vmatprep.subr.mxu0 0.0
    %312 = vmatpush1.msra.mxu0 0.0
    %313 = vmatprep.subr.mxu0 0.0
    %314 = vmatpush1.msra.mxu0 0.0
    %315 = vmatprep.subr.mxu0 0.0
    %316 = vmatpush1.msra.mxu0 0.0
    %317 = vmatprep.subr.mxu0 0.0
    %318 = vmatpush1.msra.mxu0 0.0
    %319 = vmatprep.subr.mxu0 0.0
    %320 = vmatpush1.msra.mxu0 0.0
    %321 = vmatprep.subr.mxu0 0.0
    %322 = vmatpush1.msra.mxu0 0.0
    %323 = vmatprep.subr.mxu0 0.0
    %324 = vmatpush1.msra.mxu0 0.0
    %325 = vmatprep.subr.mxu0 0.0
    %326 = vmatpush1.msra.mxu0 0.0
    %327 = vmatprep.subr.mxu0 0.0
    %328 = vmatpush1.msra.mxu0 0.0
    %329 = vmatprep.subr.mxu0 0.0
    %330 = vmatpush1.msra.mxu0 0.0
    %331 = vmatprep.mubr.f32.mxu0 0.0
    %332 = vmatmul.mubr.f32.gmra.mrb[0].mxu0 %v265
    %v333 = vpop.f32.mrb[0].mxu0
    %v334 = vadd.f32 0.0, %v333
    %v335 = vpop.f32.mrb[0].mxu0
    %v336 = vadd.f32 0.0, %v335
    %337 = vdwg.mxu0
    %338 = vmatprep.subr.mxu0 %v258
    %339 = vmatpush1.msra.mxu0 %v257
    %340 = vmatprep.subr.mxu0 %v262
    %341 = vmatpush1.msra.mxu0 %v261
    %342 = vmatprep.subr.mxu0 0.0
    %343 = vmatpush1.msra.mxu0 0.0
    %344 = vmatprep.subr.mxu0 0.0
    %345 = vmatpush1.msra.mxu0 0.0
    %346 = vmatprep.subr.mxu0 0.0
    %347 = vmatpush1.msra.mxu0 0.0
    %348 = vmatprep.subr.mxu0 0.0
    %349 = vmatpush1.msra.mxu0 0.0
    %350 = vmatprep.subr.mxu0 0.0
    %351 = vmatpush1.msra.mxu0 0.0
    %352 = vmatprep.subr.mxu0 0.0
    %353 = vmatpush1.msra.mxu0 0.0
    %354 = vmatprep.subr.mxu0 0.0
    %355 = vmatpush1.msra.mxu0 0.0
    %356 = vmatprep.subr.mxu0 0.0
    %357 = vmatpush1.msra.mxu0 0.0
    %358 = vmatprep.subr.mxu0 0.0
    %359 = vmatpush1.msra.mxu0 0.0
    %360 = vmatprep.subr.mxu0 0.0
    %361 = vmatpush1.msra.mxu0 0.0
    %362 = vmatprep.subr.mxu0 0.0
    %363 = vmatpush1.msra.mxu0 0.0
    %364 = vmatprep.subr.mxu0 0.0
    %365 = vmatpush1.msra.mxu0 0.0
    %366 = vmatprep.subr.mxu0 0.0
    %367 = vmatpush1.msra.mxu0 0.0
    %368 = vmatprep.subr.mxu0 0.0
    %369 = vmatpush1.msra.mxu0 0.0
    %370 = vmatprep.subr.mxu0 0.0
    %371 = vmatpush1.msra.mxu0 0.0
    %372 = vmatprep.subr.mxu0 0.0
    %373 = vmatpush1.msra.mxu0 0.0
    %374 = vmatprep.subr.mxu0 0.0
    %375 = vmatpush1.msra.mxu0 0.0
    %376 = vmatprep.subr.mxu0 0.0
    %377 = vmatpush1.msra.mxu0 0.0
    %378 = vmatprep.subr.mxu0 0.0
    %379 = vmatpush1.msra.mxu0 0.0
    %380 = vmatprep.subr.mxu0 0.0
    %381 = vmatpush1.msra.mxu0 0.0
    %382 = vmatprep.subr.mxu0 0.0
    %383 = vmatpush1.msra.mxu0 0.0
    %384 = vmatprep.subr.mxu0 0.0
    %385 = vmatpush1.msra.mxu0 0.0
    %386 = vmatprep.subr.mxu0 0.0
    %387 = vmatpush1.msra.mxu0 0.0
    %388 = vmatprep.subr.mxu0 0.0
    %389 = vmatpush1.msra.mxu0 0.0
    %390 = vmatprep.subr.mxu0 0.0
    %391 = vmatpush1.msra.mxu0 0.0
    %392 = vmatprep.subr.mxu0 0.0
    %393 = vmatpush1.msra.mxu0 0.0
    %394 = vmatprep.subr.mxu0 0.0
    %395 = vmatpush1.msra.mxu0 0.0
    %396 = vmatprep.subr.mxu0 0.0
    %397 = vmatpush1.msra.mxu0 0.0
    %398 = vmatprep.subr.mxu0 0.0
    %399 = vmatpush1.msra.mxu0 0.0
    %400 = vmatprep.subr.mxu0 0.0
    %401 = vmatpush1.msra.mxu0 0.0
    %402 = vmatprep.mubr.f32.mxu0 0.0
    %403 = vmatmul.mubr.f32.gmra.mrb[0].mxu0 %v265
    %v404 = vpop.f32.mrb[0].mxu0
    %v405 = vadd.f32 0.0, %v404
    %v406 = vpop.f32.mrb[0].mxu0
    %v407 = vadd.f32 0.0, %v406
    %408 = vdwg.mxu0
    %v413 = vcombine.low %v334, %v336
    %v414 = vcombine.low %v405, %v407
    %v416 = vunpack.c.l.s4 1983009808
    %v417 = vunpack.c.0.s8 %v416
    %v418 = vlaneseq
    %v419 = vshrl.u32 %v418, 7
    %v420 = vsub.s32 %v417, %v419
    %v421 = vrot.slane %v413, %v420
    %v423 = vunpack.c.l.s4 1983009808
    %v424 = vunpack.c.0.s8 %v423
    %v425 = vlaneseq
    %v426 = vshrl.u32 %v425, 7
    %v427 = vsub.s32 %v424, %v426
    %v428 = vrot.slane %v414, %v427
    %v429 = vcombine.low %v421, %v428
    %v431 = vmul.f32 %v18, %v429
    %v432 = vld [vmem:[%s3] sm:$0xff]
    %v433 = vld [vmem:[%s3 + $0x8] sm:$0xff]
    %v434 = vld [vmem:[%s3 + $0x10] sm:$0xff]
    %v435 = vld [vmem:[%s3 + $0x18] sm:$0xff]
    %v436 = vld [vmem:[%s3 + $0x20] sm:$0xff]
    %v437 = vld [vmem:[%s3 + $0x28] sm:$0xff]
    %v438 = vld [vmem:[%s3 + $0x30] sm:$0xff]
    %v439 = vld [vmem:[%s3 + $0x38] sm:$0xff]
    %v440 = vld [vmem:[%s3 + $0x40] sm:$0xff]
    %v441 = vld [vmem:[%s3 + $0x48] sm:$0xff]
    %v442 = vld [vmem:[%s3 + $0x50] sm:$0xff]
    %v443 = vld [vmem:[%s3 + $0x58] sm:$0xff]
    %v444 = vld [vmem:[%s3 + $0x60] sm:$0xff]
    %v445 = vld [vmem:[%s3 + $0x68] sm:$0xff]
    %v446 = vld [vmem:[%s3 + $0x70] sm:$0xff]
    %v447 = vld [vmem:[%s3 + $0x78] sm:$0xff]
    %v448 = vld [vmem:[%s3 + $0x80] sm:$0xff]
    %v449 = vld [vmem:[%s3 + $0x88] sm:$0xff]
    %v450 = vld [vmem:[%s3 + $0x90] sm:$0xff]
    %v451 = vld [vmem:[%s3 + $0x98] sm:$0xff]
    %v452 = vld [vmem:[%s3 + $0xa0] sm:$0xff]
    %v453 = vld [vmem:[%s3 + $0xa8] sm:$0xff]
    %v454 = vld [vmem:[%s3 + $0xb0] sm:$0xff]
    %v455 = vld [vmem:[%s3 + $0xb8] sm:$0xff]
    %v456 = vld [vmem:[%s3 + $0xc0] sm:$0xff]
    %v457 = vld [vmem:[%s3 + $0xc8] sm:$0xff]
    %v458 = vld [vmem:[%s3 + $0xd0] sm:$0xff]
    %v459 = vld [vmem:[%s3 + $0xd8] sm:$0xff]
    %v460 = vld [vmem:[%s3 + $0xe0] sm:$0xff]
    %v461 = vld [vmem:[%s3 + $0xe8] sm:$0xff]
    %v462 = vld [vmem:[%s3 + $0xf0] sm:$0xff]
    %v463 = vld [vmem:[%s3 + $0xf8] sm:$0xff]
    %v464 = vld [vmem:[%s3 + $0x100] sm:$0xff]
    %v465 = vld [vmem:[%s3 + $0x108] sm:$0xff]
    %v466 = vld [vmem:[%s3 + $0x110] sm:$0xff]
    %v467 = vld [vmem:[%s3 + $0x118] sm:$0xff]
    %v468 = vld [vmem:[%s3 + $0x120] sm:$0xff]
    %v469 = vld [vmem:[%s3 + $0x128] sm:$0xff]
    %v470 = vld [vmem:[%s3 + $0x130] sm:$0xff]
    %v471 = vld [vmem:[%s3 + $0x138] sm:$0xff]
    %v472 = vld [vmem:[%s3 + $0x140] sm:$0xff]
    %v473 = vld [vmem:[%s3 + $0x148] sm:$0xff]
    %v474 = vld [vmem:[%s3 + $0x150] sm:$0xff]
    %v475 = vld [vmem:[%s3 + $0x158] sm:$0xff]
    %v476 = vld [vmem:[%s3 + $0x160] sm:$0xff]
    %v477 = vld [vmem:[%s3 + $0x168] sm:$0xff]
    %v478 = vld [vmem:[%s3 + $0x170] sm:$0xff]
    %v479 = vld [vmem:[%s3 + $0x178] sm:$0xff]
    %v480 = vld [vmem:[%s3 + $0x180] sm:$0xff]
    %v481 = vld [vmem:[%s3 + $0x188] sm:$0xff]
    %v482 = vld [vmem:[%s3 + $0x190] sm:$0xff]
    %v483 = vld [vmem:[%s3 + $0x198] sm:$0xff]
    %v484 = vld [vmem:[%s3 + $0x1a0] sm:$0xff]
    %v485 = vld [vmem:[%s3 + $0x1a8] sm:$0xff]
    %v486 = vld [vmem:[%s3 + $0x1b0] sm:$0xff]
    %v487 = vld [vmem:[%s3 + $0x1b8] sm:$0xff]
    %v488 = vld [vmem:[%s3 + $0x1c0] sm:$0xff]
    %v489 = vld [vmem:[%s3 + $0x1c8] sm:$0xff]
    %v490 = vld [vmem:[%s3 + $0x1d0] sm:$0xff]
    %v491 = vld [vmem:[%s3 + $0x1d8] sm:$0xff]
    %v492 = vld [vmem:[%s3 + $0x1e0] sm:$0xff]
    %v493 = vld [vmem:[%s3 + $0x1e8] sm:$0xff]
    %v494 = vld [vmem:[%s3 + $0x1f0] sm:$0xff]
    %v495 = vld [vmem:[%s3 + $0x1f8] sm:$0xff]
    %v497 = vcombine.high %v431, %v431
    %v499 = vunpack.c.l.s4 1983009808
    %v500 = vunpack.c.0.s8 %v499
    %v501 = vlaneseq
    %v502 = vshrl.u32 %v501, 7
    %v503 = vsub.s32 %v500, %v502
    %v504 = vrot.slane %v431, %v503
    %v506 = vunpack.c.l.s4 1983009808
    %v507 = vunpack.c.0.s8 %v506
    %v508 = vlaneseq
    %v509 = vshrl.u32 %v508, 7
    %v510 = vsub.s32 %v507, %v509
    %v511 = vrot.slane %v497, %v510
    %v512 = vcombine.high %v504, %v504
    %v513 = vcombine.high %v511, %v511
    %518 = vmatprep.subr.mxu0 0.0
    %519 = vmatpush1.msra.mxu0 %v432
    %520 = vmatprep.subr.mxu0 0.0
    %521 = vmatpush1.msra.mxu0 %v433
    %522 = vmatprep.subr.mxu0 0.0
    %523 = vmatpush1.msra.mxu0 %v434
    %524 = vmatprep.subr.mxu0 0.0
    %525 = vmatpush1.msra.mxu0 %v435
    %526 = vmatprep.subr.mxu0 0.0
    %527 = vmatpush1.msra.mxu0 %v436
    %528 = vmatprep.subr.mxu0 0.0
    %529 = vmatpush1.msra.mxu0 %v437
    %530 = vmatprep.subr.mxu0 0.0
    %531 = vmatpush1.msra.mxu0 %v438
    %532 = vmatprep.subr.mxu0 0.0
    %533 = vmatpush1.msra.mxu0 %v439
    %534 = vmatprep.subr.mxu0 0.0
    %535 = vmatpush1.msra.mxu0 %v440
    %536 = vmatprep.subr.mxu0 0.0
    %537 = vmatpush1.msra.mxu0 %v441
    %538 = vmatprep.subr.mxu0 0.0
    %539 = vmatpush1.msra.mxu0 %v442
    %540 = vmatprep.subr.mxu0 0.0
    %541 = vmatpush1.msra.mxu0 %v443
    %542 = vmatprep.subr.mxu0 0.0
    %543 = vmatpush1.msra.mxu0 %v444
    %544 = vmatprep.subr.mxu0 0.0
    %545 = vmatpush1.msra.mxu0 %v445
    %546 = vmatprep.subr.mxu0 0.0
    %547 = vmatpush1.msra.mxu0 %v446
    %548 = vmatprep.subr.mxu0 0.0
    %549 = vmatpush1.msra.mxu0 %v447
    %550 = vmatprep.subr.mxu0 0.0
    %551 = vmatpush1.msra.mxu0 %v448
    %552 = vmatprep.subr.mxu0 0.0
    %553 = vmatpush1.msra.mxu0 %v449
    %554 = vmatprep.subr.mxu0 0.0
    %555 = vmatpush1.msra.mxu0 %v450
    %556 = vmatprep.subr.mxu0 0.0
    %557 = vmatpush1.msra.mxu0 %v451
    %558 = vmatprep.subr.mxu0 0.0
    %559 = vmatpush1.msra.mxu0 %v452
    %560 = vmatprep.subr.mxu0 0.0
    %561 = vmatpush1.msra.mxu0 %v453
    %562 = vmatprep.subr.mxu0 0.0
    %563 = vmatpush1.msra.mxu0 %v454
    %564 = vmatprep.subr.mxu0 0.0
    %565 = vmatpush1.msra.mxu0 %v455
    %566 = vmatprep.subr.mxu0 0.0
    %567 = vmatpush1.msra.mxu0 %v456
    %568 = vmatprep.subr.mxu0 0.0
    %569 = vmatpush1.msra.mxu0 %v457
    %570 = vmatprep.subr.mxu0 0.0
    %571 = vmatpush1.msra.mxu0 %v458
    %572 = vmatprep.subr.mxu0 0.0
    %573 = vmatpush1.msra.mxu0 %v459
    %574 = vmatprep.subr.mxu0 0.0
    %575 = vmatpush1.msra.mxu0 %v460
    %576 = vmatprep.subr.mxu0 0.0
    %577 = vmatpush1.msra.mxu0 %v461
    %578 = vmatprep.subr.mxu0 0.0
    %579 = vmatpush1.msra.mxu0 %v462
    %580 = vmatprep.subr.mxu0 0.0
    %581 = vmatpush1.msra.mxu0 %v463
    %582 = vmatprep.mubr.f32.mxu0 %v512
    %583 = vmatmul.mubr.f32.gmra.mrb[0].mxu0 %v504
    %v584 = vpop.f32.mrb[0].mxu0
    %v585 = vadd.f32 0.0, %v584
    %v586 = vpop.f32.mrb[0].mxu0
    %587 = vdwg.mxu0
    %588 = vmatprep.subr.mxu0 0.0
    %589 = vmatpush1.msra.mxu0 %v464
    %590 = vmatprep.subr.mxu0 0.0
    %591 = vmatpush1.msra.mxu0 %v465
    %592 = vmatprep.subr.mxu0 0.0
    %593 = vmatpush1.msra.mxu0 %v466
    %594 = vmatprep.subr.mxu0 0.0
    %595 = vmatpush1.msra.mxu0 %v467
    %596 = vmatprep.subr.mxu0 0.0
    %597 = vmatpush1.msra.mxu0 %v468
    %598 = vmatprep.subr.mxu0 0.0
    %599 = vmatpush1.msra.mxu0 %v469
    %600 = vmatprep.subr.mxu0 0.0
    %601 = vmatpush1.msra.mxu0 %v470
    %602 = vmatprep.subr.mxu0 0.0
    %603 = vmatpush1.msra.mxu0 %v471
    %604 = vmatprep.subr.mxu0 0.0
    %605 = vmatpush1.msra.mxu0 %v472
    %606 = vmatprep.subr.mxu0 0.0
    %607 = vmatpush1.msra.mxu0 %v473
    %608 = vmatprep.subr.mxu0 0.0
    %609 = vmatpush1.msra.mxu0 %v474
    %610 = vmatprep.subr.mxu0 0.0
    %611 = vmatpush1.msra.mxu0 %v475
    %612 = vmatprep.subr.mxu0 0.0
    %613 = vmatpush1.msra.mxu0 %v476
    %614 = vmatprep.subr.mxu0 0.0
    %615 = vmatpush1.msra.mxu0 %v477
    %616 = vmatprep.subr.mxu0 0.0
    %617 = vmatpush1.msra.mxu0 %v478
    %618 = vmatprep.subr.mxu0 0.0
    %619 = vmatpush1.msra.mxu0 %v479
    %620 = vmatprep.subr.mxu0 0.0
    %621 = vmatpush1.msra.mxu0 %v480
    %622 = vmatprep.subr.mxu0 0.0
    %623 = vmatpush1.msra.mxu0 %v481
    %624 = vmatprep.subr.mxu0 0.0
    %625 = vmatpush1.msra.mxu0 %v482
    %626 = vmatprep.subr.mxu0 0.0
    %627 = vmatpush1.msra.mxu0 %v483
    %628 = vmatprep.subr.mxu0 0.0
    %629 = vmatpush1.msra.mxu0 %v484
    %630 = vmatprep.subr.mxu0 0.0
    %631 = vmatpush1.msra.mxu0 %v485
    %632 = vmatprep.subr.mxu0 0.0
    %633 = vmatpush1.msra.mxu0 %v486
    %634 = vmatprep.subr.mxu0 0.0
    %635 = vmatpush1.msra.mxu0 %v487
    %636 = vmatprep.subr.mxu0 0.0
    %637 = vmatpush1.msra.mxu0 %v488
    %638 = vmatprep.subr.mxu0 0.0
    %639 = vmatpush1.msra.mxu0 %v489
    %640 = vmatprep.subr.mxu0 0.0
    %641 = vmatpush1.msra.mxu0 %v490
    %642 = vmatprep.subr.mxu0 0.0
    %643 = vmatpush1.msra.mxu0 %v491
    %644 = vmatprep.subr.mxu0 0.0
    %645 = vmatpush1.msra.mxu0 %v492
    %646 = vmatprep.subr.mxu0 0.0
    %647 = vmatpush1.msra.mxu0 %v493
    %648 = vmatprep.subr.mxu0 0.0
    %649 = vmatpush1.msra.mxu0 %v494
    %650 = vmatprep.subr.mxu0 0.0
    %651 = vmatpush1.msra.mxu0 %v495
    %652 = vmatprep.mubr.f32.mxu0 %v513
    %653 = vmatmul.mubr.f32.gmra.mrb[0].mxu0 %v511
    %v654 = vpop.f32.mrb[0].mxu0
    %v655 = vadd.f32 %v585, %v654
    %v656 = vpop.f32.mrb[0].mxu0
    %657 = vdwg.mxu0
    %v658 = vrcp.pop %v254
    %v659 = vmul.f32 %v655, %v658
    %vm660 = vcmask 254976
    %661 = vst.msk [vmem:[#allocation2] sm:$0x3] %vm660, %v659
    // Predicated region
    $region18: #{tpu_custom_call.1} parent=1 // pred_check
      _
    $region19: #{tpu_custom_call.1} parent=1 // pred_check_branch
      %663 = sbr.rel (0) target = $region21
    $region20: #{tpu_custom_call.1} parent=1 // pred_region
      %s665 = ssub.s32 32, 32
      %666 = vsyncadd [#allocation3], %s665
      %s668 = sshll.u32 [#allocation2], 4
      %s669 = int_to_ptr.vmem [resolvable:$true] %s668
      %671 = dma.vmem_to_hbm [thread:$0]  %s669, 32, %s4, [#allocation3]
    $region21: #{tpu_custom_call.1} parent=1 // pred_fallthru
      _
    // Predicated region
    $region22: #{tpu_custom_call.1} parent=1 // pred_check
      _
    $region23: #{tpu_custom_call.1} parent=1 // pred_check_branch
      %673 = sbr.rel (0) target = $region25
    $region24: #{tpu_custom_call.1} parent=1 // pred_region
      %674 = dma.done [#allocation3], 32
    $region25: #{tpu_custom_call.1} parent=1 // pred_fallthru
      _
    %675 = vsyncpa [#allocation3], 1

</llo_original>
